<compile_context>
chip_gen: v5e
topology: v5e:2x2
jax: 0.10.0
libtpu: 0.0.40
codegen_flags: <defaults>
</compile_context>

<pallas_src>
import jax
import jax.numpy as jnp
from jax import lax
from jax.experimental import pallas as pl
from jax.experimental.pallas import tpu as pltpu


def _banded_weights(wt, W):
    """HWIO (3,3,Cin,Cout) -> K-stacked banded matrix (3*W*Cin, W*Cout).

    Row index = kh*(W*Cin) + wp*Cin + ci, col index = w*Cout + co, value
    wt[kh, wp-w+1, ci, co] when |wp-w| <= 1 else 0: the kw taps and the width
    zero-padding of a padding=1 conv are folded into the weight, so one matmul
    against the kh-stacked im2row input produces the whole (rows, W*Cout) tile.
    """
    _, _, Cin, Cout = wt.shape
    kw = jnp.arange(3)[:, None, None]
    wp = jnp.arange(W)[None, :, None]
    w = jnp.arange(W)[None, None, :]
    sel = (wp == w + kw - 1).astype(wt.dtype)        # (3, W, W), 0/1
    B = jnp.einsum("kpw,hkio->hpiwo", sel, wt)       # (3, W, Cin, W, Cout), exact copies
    return B.reshape(3 * W * Cin, W * Cout)


def encoder_block(x_nhwc, w1, b1, w2, b2):
    """x_nhwc: (N,H,W,Cin) f32, weights HWIO.

    Returns (conv_out (N,H,W,Cout), pool_out (N,H//2,W//2,Cout)),
    i.e. EncoderBlock.forward with conv(x) computed once.
    """
    N, H, W, Cin = x_nhwc.shape
    Cout = w1.shape[-1]
    WCi, WCo = W * Cin, W * Cout
    K1, K2 = 3 * WCi, 3 * WCo
    out_dtype = x_nhwc.dtype

    def kernel(x_ref, w1_ref, b1_ref, w2_ref, b2_ref, conv_ref, pool_ref):
        # Per grid step: one batch element.
        # x_ref   : (H, 3*W*Cin)   bf16 im2row (kh-stacked) input rows
        # w1_ref  : (3*W*Cin, W*Cout)  bf16 K-stacked banded conv1 weights
        # b1_ref  : (1, W*Cout)    f32
        # w2_ref  : (3*W*Cout, W*Cout) bf16 K-stacked banded conv2 weights
        # b2_ref  : (1, W*Cout)    f32
        # conv_ref: (H, W*Cout)    lane-dense ConvBlock output
        # pool_ref: (H//2, W*Cout) lane-dense pool output (even Cout-blocks valid)

        # ---- conv1 + ReLU: single K=3*W*Cin matmul (im2row done in wrapper) ----
        y1 = jnp.dot(x_ref[...], w1_ref[...], preferred_element_type=jnp.float32)
        y1 = jnp.maximum(y1 + b1_ref[...], 0.0)                     # (H, WCo) f32

        # ---- conv2 halo from register-resident y1 (no VMEM scratch):
        #      +/-1 row shifts with zero halo rows via 0/1 shift matrices on the
        #      idle MXU (exact picks, boundary rows already zero) ----
        ri = lax.broadcasted_iota(jnp.int32, (H, H), 0)
        ci = lax.broadcasted_iota(jnp.int32, (H, H), 1)
        up_mat = (ci == ri - 1).astype(jnp.float32)   # (U@y)[h] = y[h-1], row 0 -> 0
        dn_mat = (ci == ri + 1).astype(jnp.float32)   # (D@y)[h] = y[h+1], row H-1 -> 0
        up = jnp.dot(up_mat, y1, preferred_element_type=jnp.float32)
        dn = jnp.dot(dn_mat, y1, preferred_element_type=jnp.float32)
        slab2 = jnp.concatenate([up, y1, dn], axis=-1).astype(jnp.bfloat16)

        # ---- conv2 + ReLU: single K=3*W*Cout matmul ----
        y2 = jnp.dot(slab2, w2_ref[...], preferred_element_type=jnp.float32)
        y2 = jnp.maximum(y2 + b2_ref[...], 0.0)                     # (H, WCo) f32
        conv_ref[...] = y2.astype(conv_ref.dtype)                   # full 128-lane store

        # ---- MaxPool2d(2,2) from the register value y2 (no conv_ref read-back) ----
        # Row pairs: even/odd row selection (exact 0/1 matmuls) + max.
        rj = lax.broadcasted_iota(jnp.int32, (H // 2, H), 0)
        cj = lax.broadcasted_iota(jnp.int32, (H // 2, H), 1)
        pick_even = (cj == 2 * rj).astype(jnp.float32)
        pick_odd = (cj == 2 * rj + 1).astype(jnp.float32)
        rowmax = jnp.maximum(
            jnp.dot(pick_even, y2, preferred_element_type=jnp.float32),
            jnp.dot(pick_odd, y2, preferred_element_type=jnp.float32))   # (H//2, WCo)
        # Width pairs: one lane roll (XLU) + max. Lane l of the rolled value holds
        # rowmax[l + Cout], so even Cout-wide blocks of `m` contain the pair max;
        # odd blocks are padding dropped by the wrapper (keeps the store lane-dense).
        m = jnp.maximum(rowmax, pltpu.roll(rowmax, shift=WCo - Cout, axis=1))
        pool_ref[...] = m.astype(pool_ref.dtype)                    # full 128-lane store

    # ---- wrapper-side layout plumbing (contiguous reshapes / tiny einsum) ----
    x_hp = jnp.pad(x_nhwc, ((0, 0), (1, 1), (0, 0), (0, 0))).reshape(N, H + 2, WCi)
    # im2row: kh-stacked shifted slabs along K -> conv1 becomes one matmul.
    x_i2r = jnp.concatenate([x_hp[:, kh:kh + H, :] for kh in range(3)], axis=-1)
    x_i2r = x_i2r.reshape(N * H, K1).astype(jnp.bfloat16)
    W1 = _banded_weights(w1, W).astype(jnp.bfloat16)                 # (3*WCi, WCo)
    W2 = _banded_weights(w2, W).astype(jnp.bfloat16)                 # (3*WCo, WCo)
    b1r = jnp.tile(b1.reshape(1, Cout), (1, W)).astype(jnp.float32)  # (1, WCo)
    b2r = jnp.tile(b2.reshape(1, Cout), (1, W)).astype(jnp.float32)

    grid_spec = pltpu.PrefetchScalarGridSpec(
        num_scalar_prefetch=0,
        grid=(N,),   # batch axis parallel across TensorCores on v7x
        in_specs=[
            pl.BlockSpec((H, K1), lambda n: (n, 0)),
            pl.BlockSpec((K1, WCo), lambda n: (0, 0)),
            pl.BlockSpec((1, WCo), lambda n: (0, 0)),
            pl.BlockSpec((K2, WCo), lambda n: (0, 0)),
            pl.BlockSpec((1, WCo), lambda n: (0, 0)),
        ],
        out_specs=[
            pl.BlockSpec((H, WCo), lambda n: (n, 0)),
            pl.BlockSpec((H // 2, WCo), lambda n: (n, 0)),
        ],
    )

    conv_flat, pool_flat = pl.pallas_call(
        kernel,
        out_shape=(jax.ShapeDtypeStruct((N * H, WCo), out_dtype),
                   jax.ShapeDtypeStruct((N * (H // 2), WCo), out_dtype)),
        grid_spec=grid_spec,
        compiler_params=pltpu.CompilerParams(
            dimension_semantics=("parallel",)),
    )(x_i2r, W1, b1r, W2, b2r)

    conv_out = conv_flat.reshape(N, H, W, Cout)
    # Pool came back width-padded (128 lanes); keep only the even Cout-blocks.
    pool_out = pool_flat.reshape(N, H // 2, W // 2, 2, Cout)[:, :, :, 0, :]
    return conv_out, pool_out


def reference(x_nhwc, w1, b1, w2, b2):
    """Pure-JAX reference of EncoderBlock.forward (NHWC).

    Mirrors the kernel's bf16 MXU-operand casts (f32 accumulation) so the
    comparison tolerance stays tight and meaningful.
    """
    dn = lax.conv_dimension_numbers(x_nhwc.shape, w1.shape, ("NHWC", "HWIO", "NHWC"))

    def conv_relu(x, w, b):
        y = lax.conv_general_dilated(
            x.astype(jnp.bfloat16), w.astype(jnp.bfloat16), (1, 1),
            ((1, 1), (1, 1)), dimension_numbers=dn,
            preferred_element_type=jnp.float32)
        return jnp.maximum(y + b, 0.0)

    y = conv_relu(conv_relu(x_nhwc, w1, b1), w2, b2)
    N, H, W, C = y.shape
    p = y.reshape(N, H // 2, 2, W // 2, 2, C).max(axis=(2, 4))
    return y.astype(x_nhwc.dtype), p.astype(x_nhwc.dtype)


if __name__ == "__main__":
    # small shapes consistent with the module: batch=2, in_ch=4, out_ch=8, 16x16 spatial
    N, Cin, Cout, H, W = 2, 4, 8, 16, 16

    key = jax.random.PRNGKey(0)
    k1, k2, k3, k4, k5 = jax.random.split(key, 5)

    x_nchw = jax.random.normal(k1, (N, Cin, H, W), jnp.float32)    # PyTorch NCHW input
    x = jnp.transpose(x_nchw, (0, 2, 3, 1))                        # -> NHWC for the kernel
    w1 = jax.random.normal(k2, (3, 3, Cin, Cout), jnp.float32) / jnp.sqrt(9.0 * Cin)
    b1 = 0.1 * jax.random.normal(k3, (Cout,), jnp.float32)
    w2 = jax.random.normal(k4, (3, 3, Cout, Cout), jnp.float32) / jnp.sqrt(9.0 * Cout)
    b2 = 0.1 * jax.random.normal(k5, (Cout,), jnp.float32)

    conv_out, pool_out = jax.jit(encoder_block)(x, w1, b1, w2, b2)
    jax.block_until_ready((conv_out, pool_out))

    ref_conv, ref_pool = reference(x, w1, b1, w2, b2)
    assert conv_out.shape == (N, H, W, Cout)
    assert pool_out.shape == (N, H // 2, W // 2, Cout)
    # bf16 MXU operands (mirrored in the reference) -> slightly loosened tolerance.
    assert jnp.allclose(conv_out, ref_conv, atol=2e-2, rtol=2e-2)
    assert jnp.allclose(pool_out, ref_pool, atol=2e-2, rtol=2e-2)

    print("KERNEL_OK")
</pallas_src>

<mosaic_0001>
module attributes {stable_mosaic.version = 11 : i64} {
  func.func @kernel(%arg0: i32, %arg1: memref<16x192xbf16, #tpu.memory_space<vmem>>, %arg2: memref<192x128xbf16, #tpu.memory_space<vmem>>, %arg3: memref<1x128xf32, #tpu.memory_space<vmem>>, %arg4: memref<384x128xbf16, #tpu.memory_space<vmem>>, %arg5: memref<1x128xf32, #tpu.memory_space<vmem>>, %arg6: memref<16x128xf32, #tpu.memory_space<vmem>>, %arg7: memref<8x128xf32, #tpu.memory_space<vmem>>) attributes {dimension_semantics = [#tpu.dimension_semantics<parallel>], iteration_bounds = array<i64: 2>, scalar_prefetch = 0 : i64, scratch_operands = 0 : i64, tpu.core_type = #tpu.core_type<tc>, window_params = [{transform_indices = @transform_0, window_bounds = array<i64: 16, 192>}, {pipeline_mode = #tpu.pipeline_mode<synchronous>, transform_indices = @transform_1, window_bounds = array<i64: 192, 128>}, {pipeline_mode = #tpu.pipeline_mode<synchronous>, transform_indices = @transform_2, window_bounds = array<i64: 1, 128>}, {pipeline_mode = #tpu.pipeline_mode<synchronous>, transform_indices = @transform_3, window_bounds = array<i64: 384, 128>}, {pipeline_mode = #tpu.pipeline_mode<synchronous>, transform_indices = @transform_4, window_bounds = array<i64: 1, 128>}, {transform_indices = @transform_5, window_bounds = array<i64: 16, 128>}, {transform_indices = @transform_6, window_bounds = array<i64: 8, 128>}]} {
    %c0 = arith.constant 0 : index
    %c0_0 = arith.constant 0 : index
    %0 = vector.load %arg1[%c0, %c0_0] : memref<16x192xbf16, #tpu.memory_space<vmem>>, vector<16x192xbf16>
    %c0_1 = arith.constant 0 : index
    %c0_2 = arith.constant 0 : index
    %1 = vector.load %arg2[%c0_1, %c0_2] : memref<192x128xbf16, #tpu.memory_space<vmem>>, vector<192x128xbf16>
    %cst = arith.constant dense<0.000000e+00> : vector<16x128xf32>
    %2 = tpu.matmul %0, %1, %cst {dimension_numbers = #tpu.dot_dimension_numbers<[1], [0], [0], [1], [0, 0, 1, 1], [], []>} : vector<16x192xbf16>, vector<192x128xbf16>, vector<16x128xf32> -> vector<16x128xf32>
    %c0_3 = arith.constant 0 : index
    %c0_4 = arith.constant 0 : index
    %3 = vector.load %arg3[%c0_3, %c0_4] : memref<1x128xf32, #tpu.memory_space<vmem>>, vector<1x128xf32>
    %4 = vector.broadcast %3 : vector<1x128xf32> to vector<16x128xf32>
    %5 = arith.addf %2, %4 : vector<16x128xf32>
    %cst_5 = arith.constant 0.000000e+00 : f32
    %6 = vector.broadcast %cst_5 : f32 to vector<16x128xf32>
    %7 = arith.maximumf %5, %6 : vector<16x128xf32>
    %8 = tpu.iota {dimensions = array<i32: 0>} : vector<16x16xi32>
    %9 = tpu.iota {dimensions = array<i32: 1>} : vector<16x16xi32>
    %c1_i32 = arith.constant 1 : i32
    %10 = vector.broadcast %c1_i32 : i32 to vector<16x16xi32>
    %11 = arith.subi %8, %10 : vector<16x16xi32>
    %12 = arith.cmpi eq, %9, %11 : vector<16x16xi32>
    %13 = arith.extui %12 : vector<16x16xi1> to vector<16x16xi32>
    %14 = arith.sitofp %13 : vector<16x16xi32> to vector<16x16xf32>
    %c1_i32_6 = arith.constant 1 : i32
    %15 = vector.broadcast %c1_i32_6 : i32 to vector<16x16xi32>
    %16 = arith.addi %8, %15 : vector<16x16xi32>
    %17 = arith.cmpi eq, %9, %16 : vector<16x16xi32>
    %18 = arith.extui %17 : vector<16x16xi1> to vector<16x16xi32>
    %19 = arith.sitofp %18 : vector<16x16xi32> to vector<16x16xf32>
    %cst_7 = arith.constant dense<0.000000e+00> : vector<16x128xf32>
    %20 = tpu.matmul %14, %7, %cst_7 {dimension_numbers = #tpu.dot_dimension_numbers<[1], [0], [0], [1], [0, 0, 1, 1], [], []>} : vector<16x16xf32>, vector<16x128xf32>, vector<16x128xf32> -> vector<16x128xf32>
    %cst_8 = arith.constant dense<0.000000e+00> : vector<16x128xf32>
    %21 = tpu.matmul %19, %7, %cst_8 {dimension_numbers = #tpu.dot_dimension_numbers<[1], [0], [0], [1], [0, 0, 1, 1], [], []>} : vector<16x16xf32>, vector<16x128xf32>, vector<16x128xf32> -> vector<16x128xf32>
    %22 = tpu.concatenate %20, %7, %21 in 1 : vector<16x128xf32>, vector<16x128xf32>, vector<16x128xf32> -> vector<16x384xf32>
    %23 = arith.truncf %22 : vector<16x384xf32> to vector<16x384xbf16>
    %c0_9 = arith.constant 0 : index
    %c0_10 = arith.constant 0 : index
    %24 = vector.load %arg4[%c0_9, %c0_10] : memref<384x128xbf16, #tpu.memory_space<vmem>>, vector<384x128xbf16>
    %cst_11 = arith.constant dense<0.000000e+00> : vector<16x128xf32>
    %25 = tpu.matmul %23, %24, %cst_11 {dimension_numbers = #tpu.dot_dimension_numbers<[1], [0], [0], [1], [0, 0, 1, 1], [], []>} : vector<16x384xbf16>, vector<384x128xbf16>, vector<16x128xf32> -> vector<16x128xf32>
    %c0_12 = arith.constant 0 : index
    %c0_13 = arith.constant 0 : index
    %26 = vector.load %arg5[%c0_12, %c0_13] : memref<1x128xf32, #tpu.memory_space<vmem>>, vector<1x128xf32>
    %27 = vector.broadcast %26 : vector<1x128xf32> to vector<16x128xf32>
    %28 = arith.addf %25, %27 : vector<16x128xf32>
    %cst_14 = arith.constant 0.000000e+00 : f32
    %29 = vector.broadcast %cst_14 : f32 to vector<16x128xf32>
    %30 = arith.maximumf %28, %29 : vector<16x128xf32>
    %c0_15 = arith.constant 0 : index
    %c0_16 = arith.constant 0 : index
    %31 = vector.load %arg6[%c0_15, %c0_16] : memref<16x128xf32, #tpu.memory_space<vmem>>, vector<16x128xf32>
    tpu.vector_store %arg6[%c0_15, %c0_16], %30 {strides = array<i32>} : memref<16x128xf32, #tpu.memory_space<vmem>>, vector<16x128xf32>,
    %32 = tpu.iota {dimensions = array<i32: 0>} : vector<8x16xi32>
    %33 = tpu.iota {dimensions = array<i32: 1>} : vector<8x16xi32>
    %c2_i32 = arith.constant 2 : i32
    %34 = vector.broadcast %c2_i32 : i32 to vector<8x16xi32>
    %35 = arith.muli %34, %32 : vector<8x16xi32>
    %36 = arith.cmpi eq, %33, %35 : vector<8x16xi32>
    %37 = arith.extui %36 : vector<8x16xi1> to vector<8x16xi32>
    %38 = arith.sitofp %37 : vector<8x16xi32> to vector<8x16xf32>
    %c2_i32_17 = arith.constant 2 : i32
    %39 = vector.broadcast %c2_i32_17 : i32 to vector<8x16xi32>
    %40 = arith.muli %39, %32 : vector<8x16xi32>
    %c1_i32_18 = arith.constant 1 : i32
    %41 = vector.broadcast %c1_i32_18 : i32 to vector<8x16xi32>
    %42 = arith.addi %40, %41 : vector<8x16xi32>
    %43 = arith.cmpi eq, %33, %42 : vector<8x16xi32>
    %44 = arith.extui %43 : vector<8x16xi1> to vector<8x16xi32>
    %45 = arith.sitofp %44 : vector<8x16xi32> to vector<8x16xf32>
    %cst_19 = arith.constant dense<0.000000e+00> : vector<8x128xf32>
    %46 = tpu.matmul %38, %30, %cst_19 {dimension_numbers = #tpu.dot_dimension_numbers<[1], [0], [0], [1], [0, 0, 1, 1], [], []>} : vector<8x16xf32>, vector<16x128xf32>, vector<8x128xf32> -> vector<8x128xf32>
    %cst_20 = arith.constant dense<0.000000e+00> : vector<8x128xf32>
    %47 = tpu.matmul %45, %30, %cst_20 {dimension_numbers = #tpu.dot_dimension_numbers<[1], [0], [0], [1], [0, 0, 1, 1], [], []>} : vector<8x16xf32>, vector<16x128xf32>, vector<8x128xf32> -> vector<8x128xf32>
    %48 = arith.maximumf %46, %47 : vector<8x128xf32>
    %c120_i32 = arith.constant 120 : i32
    %49 = tpu.dynamic_rotate %48 by %c120_i32 dim 1 : vector<8x128xf32>, i32 -> vector<8x128xf32>
    %50 = arith.maximumf %48, %49 : vector<8x128xf32>
    %c0_21 = arith.constant 0 : index
    %c0_22 = arith.constant 0 : index
    %51 = vector.load %arg7[%c0_21, %c0_22] : memref<8x128xf32, #tpu.memory_space<vmem>>, vector<8x128xf32>
    tpu.vector_store %arg7[%c0_21, %c0_22], %50 {strides = array<i32>} : memref<8x128xf32, #tpu.memory_space<vmem>>, vector<8x128xf32>,
    return
  }
  func.func @transform_0(%arg0: i32) -> (i32, i32) {
    %c0_i32 = arith.constant 0 : i32
    %c0_i32_0 = arith.constant 0 : i32
    return %arg0, %c0_i32 : i32, i32
  }
  func.func @transform_1(%arg0: i32) -> (i32, i32) {
    %c0_i32 = arith.constant 0 : i32
    %c0_i32_0 = arith.constant 0 : i32
    %c0_i32_1 = arith.constant 0 : i32
    return %c0_i32, %c0_i32_0 : i32, i32
  }
  func.func @transform_2(%arg0: i32) -> (i32, i32) {
    %c0_i32 = arith.constant 0 : i32
    %c0_i32_0 = arith.constant 0 : i32
    %c0_i32_1 = arith.constant 0 : i32
    return %c0_i32, %c0_i32_0 : i32, i32
  }
  func.func @transform_3(%arg0: i32) -> (i32, i32) {
    %c0_i32 = arith.constant 0 : i32
    %c0_i32_0 = arith.constant 0 : i32
    %c0_i32_1 = arith.constant 0 : i32
    return %c0_i32, %c0_i32_0 : i32, i32
  }
  func.func @transform_4(%arg0: i32) -> (i32, i32) {
    %c0_i32 = arith.constant 0 : i32
    %c0_i32_0 = arith.constant 0 : i32
    %c0_i32_1 = arith.constant 0 : i32
    return %c0_i32, %c0_i32_0 : i32, i32
  }
  func.func @transform_5(%arg0: i32) -> (i32, i32) {
    %c0_i32 = arith.constant 0 : i32
    %c0_i32_0 = arith.constant 0 : i32
    return %arg0, %c0_i32 : i32, i32
  }
  func.func @transform_6(%arg0: i32) -> (i32, i32) {
    %c0_i32 = arith.constant 0 : i32
    %c0_i32_0 = arith.constant 0 : i32
    return %arg0, %c0_i32 : i32, i32
  }
}

</mosaic_0001>

<llo_original>
// kernel: encoder_block.1
$region0: #{encoder_block.1}
  #allocation0 [shape = 'u32[]', space=smem, size = 0x4, offset = 0x4, fixed_abs, tag = 'smem constant byte address 0x4 - core index']
  #allocation1 [shape = 'u32[72,128]{1,0:T(1,128)}', space=vmem, size = 0x9000, scoped, tag = 'internal scratch']
  %s0 = inlined_call_operand.vmem [shape: bf16[32,192], index: 0, kind: input, shape index: {}]
  %s1 = inlined_call_operand.vmem [shape: bf16[192,128], index: 1, kind: input, shape index: {}]
  %s2 = inlined_call_operand.vmem [shape: f32[1,128], index: 2, kind: input, shape index: {}]
  %s3 = inlined_call_operand.vmem [shape: bf16[384,128], index: 3, kind: input, shape index: {}]
  %s4 = inlined_call_operand.vmem [shape: f32[1,128], index: 4, kind: input, shape index: {}]
  %s5 = inlined_call_operand.vmem [shape: f32[32,128], index: 5, kind: output, shape index: {0}]
  %s6 = inlined_call_operand.vmem [shape: f32[16,128], index: 6, kind: output, shape index: {1}]
  %7 = xla_tuple %s5, %s6
  %s8 = sld [smem:[#allocation0]]
  $region61: #{encoder_block.1} parent=0
    _
  %s10 = ssub.s32 1, %s8
  %s11 = scalar_select 0, %s10, %s8
  loop: start=0, step=1, limit=4
  $region2: #{encoder_block.1} parent=0 // loop_pre_header
    _
  $region3: #{encoder_block.1} parent=0 // loop_header
    %s13 = sphi 0, %s17
    %p14 = scmp.ge.s32.totalorder %s13, 4
    %s23 = sphi 0, %s25
    %s26 = sphi 0, %s23
    %s27 = sphi 0, %s26
    %s43 = sphi 0, %s27
    %s47 = sphi 0, %s47
    %s49 = sphi 0, %s47
    %s50 = sphi 0, %s49
    %s64 = sphi 0, %s50
    %s68 = sphi 0, %s68
    %s70 = sphi 0, %s68
    %s71 = sphi 0, %s70
    %s85 = sphi 0, %s71
    %s89 = sphi 0, %s89
    %s91 = sphi 0, %s89
    %s92 = sphi 0, %s91
    %s106 = sphi 0, %s92
    %s110 = sphi 0, %s110
    %s112 = sphi 0, %s110
    %s113 = sphi 0, %s112
    %s127 = sphi 0, %s113
    %s133 = sphi 0, %s135
    %s136 = sphi 0, %s133
    %s137 = sphi 0, %s136
    %s153 = sphi 0, %s137
    %s159 = sphi 0, %s161
    %s162 = sphi 0, %s159
    %s163 = sphi 0, %s162
    %s179 = sphi 0, %s163
  $region4: #{encoder_block.1} parent=0 // loop_header_branch
    %16 = sbr.rel (%p14) target = $region8
  $region5: #{encoder_block.1} parent=0 // loop_body
    %s18 = ssub.s32 %s13, 1
    %s19 = ssub.s32 %s13, 2
    %s20 = sadd.s32 %s13, 1
    %s21 = ssub.s32 %s13, %s20
    %p22 = scmp.eq.s32.totalorder %s21, 0
    %s24 = sadd.s32 %s23, 1
    %s25 = scalar_select %p22, %s23, %s24
    %p28 = pneg %p22
    %p29 = scmp.eq.s32.totalorder %s13, 1
    %p30 = por %p28, %p29
    %p31 = scmp.ne.s32.totalorder %s23, %s26
    %p32 = scmp.eq.s32.totalorder %s13, 0
    %p33 = por %p31, %p32
    %p34 = scmp.ne.s32.totalorder %s23, %s26
    %p35 = scmp.eq.s32.totalorder %s18, 1
    %p36 = por %p34, %p35
    %p37 = scmp.ne.s32.totalorder %s26, %s27
    %p38 = scmp.eq.s32.totalorder %s18, 0
    %p39 = por %p37, %p38
    %p40 = scmp.ne.s32.totalorder %s26, %s27
    %p41 = scmp.eq.s32.totalorder %s19, 1
    %p42 = por %p40, %p41
    %p44 = scmp.ne.s32.totalorder %s27, %s43
    %p45 = scmp.eq.s32.totalorder %s19, 0
    %p46 = por %p44, %p45
    %s48 = sadd.s32 %s47, 1
    %p51 = scmp.eq.s32.totalorder %s13, 1
    %p52 = scmp.ne.s32.totalorder %s47, %s49
    %p53 = scmp.eq.s32.totalorder %s13, 0
    %p54 = por %p52, %p53
    %p55 = scmp.ne.s32.totalorder %s47, %s49
    %p56 = scmp.eq.s32.totalorder %s18, 1
    %p57 = por %p55, %p56
    %p58 = scmp.ne.s32.totalorder %s49, %s50
    %p59 = scmp.eq.s32.totalorder %s18, 0
    %p60 = por %p58, %p59
    %p61 = scmp.ne.s32.totalorder %s49, %s50
    %p62 = scmp.eq.s32.totalorder %s19, 1
    %p63 = por %p61, %p62
    %p65 = scmp.ne.s32.totalorder %s50, %s64
    %p66 = scmp.eq.s32.totalorder %s19, 0
    %p67 = por %p65, %p66
    %s69 = sadd.s32 %s68, 1
    %p72 = scmp.eq.s32.totalorder %s13, 1
    %p73 = scmp.ne.s32.totalorder %s68, %s70
    %p74 = scmp.eq.s32.totalorder %s13, 0
    %p75 = por %p73, %p74
    %p76 = scmp.ne.s32.totalorder %s68, %s70
    %p77 = scmp.eq.s32.totalorder %s18, 1
    %p78 = por %p76, %p77
    %p79 = scmp.ne.s32.totalorder %s70, %s71
    %p80 = scmp.eq.s32.totalorder %s18, 0
    %p81 = por %p79, %p80
    %p82 = scmp.ne.s32.totalorder %s70, %s71
    %p83 = scmp.eq.s32.totalorder %s19, 1
    %p84 = por %p82, %p83
    %p86 = scmp.ne.s32.totalorder %s71, %s85
    %p87 = scmp.eq.s32.totalorder %s19, 0
    %p88 = por %p86, %p87
    %s90 = sadd.s32 %s89, 1
    %p93 = scmp.eq.s32.totalorder %s13, 1
    %p94 = scmp.ne.s32.totalorder %s89, %s91
    %p95 = scmp.eq.s32.totalorder %s13, 0
    %p96 = por %p94, %p95
    %p97 = scmp.ne.s32.totalorder %s89, %s91
    %p98 = scmp.eq.s32.totalorder %s18, 1
    %p99 = por %p97, %p98
    %p100 = scmp.ne.s32.totalorder %s91, %s92
    %p101 = scmp.eq.s32.totalorder %s18, 0
    %p102 = por %p100, %p101
    %p103 = scmp.ne.s32.totalorder %s91, %s92
    %p104 = scmp.eq.s32.totalorder %s19, 1
    %p105 = por %p103, %p104
    %p107 = scmp.ne.s32.totalorder %s92, %s106
    %p108 = scmp.eq.s32.totalorder %s19, 0
    %p109 = por %p107, %p108
    %s111 = sadd.s32 %s110, 1
    %p114 = scmp.eq.s32.totalorder %s13, 1
    %p115 = scmp.ne.s32.totalorder %s110, %s112
    %p116 = scmp.eq.s32.totalorder %s13, 0
    %p117 = por %p115, %p116
    %p118 = scmp.ne.s32.totalorder %s110, %s112
    %p119 = scmp.eq.s32.totalorder %s18, 1
    %p120 = por %p118, %p119
    %p121 = scmp.ne.s32.totalorder %s112, %s113
    %p122 = scmp.eq.s32.totalorder %s18, 0
    %p123 = por %p121, %p122
    %p124 = scmp.ne.s32.totalorder %s112, %s113
    %p125 = scmp.eq.s32.totalorder %s19, 1
    %p126 = por %p124, %p125
    %p128 = scmp.ne.s32.totalorder %s113, %s127
    %p129 = scmp.eq.s32.totalorder %s19, 0
    %p130 = por %p128, %p129
    %s131 = ssub.s32 %s13, %s20
    %p132 = scmp.eq.s32.totalorder %s131, 0
    %s134 = sadd.s32 %s133, 1
    %s135 = scalar_select %p132, %s133, %s134
    %p138 = pneg %p132
    %p139 = scmp.eq.s32.totalorder %s13, 1
    %p140 = por %p138, %p139
    %p141 = scmp.ne.s32.totalorder %s133, %s136
    %p142 = scmp.eq.s32.totalorder %s13, 0
    %p143 = por %p141, %p142
    %p144 = scmp.ne.s32.totalorder %s133, %s136
    %p145 = scmp.eq.s32.totalorder %s18, 1
    %p146 = por %p144, %p145
    %p147 = scmp.ne.s32.totalorder %s136, %s137
    %p148 = scmp.eq.s32.totalorder %s18, 0
    %p149 = por %p147, %p148
    %p150 = scmp.ne.s32.totalorder %s136, %s137
    %p151 = scmp.eq.s32.totalorder %s19, 1
    %p152 = por %p150, %p151
    %p154 = scmp.ne.s32.totalorder %s137, %s153
    %p155 = scmp.eq.s32.totalorder %s19, 0
    %p156 = por %p154, %p155
    %s157 = ssub.s32 %s13, %s20
    %p158 = scmp.eq.s32.totalorder %s157, 0
    %s160 = sadd.s32 %s159, 1
    %s161 = scalar_select %p158, %s159, %s160
    %p164 = pneg %p158
    %p165 = scmp.eq.s32.totalorder %s13, 1
    %p166 = por %p164, %p165
    %p167 = scmp.ne.s32.totalorder %s159, %s162
    %p168 = scmp.eq.s32.totalorder %s13, 0
    %p169 = por %p167, %p168
    %p170 = scmp.ne.s32.totalorder %s159, %s162
    %p171 = scmp.eq.s32.totalorder %s18, 1
    %p172 = por %p170, %p171
    %p173 = scmp.ne.s32.totalorder %s162, %s163
    %p174 = scmp.eq.s32.totalorder %s18, 0
    %p175 = por %p173, %p174
    %p176 = scmp.ne.s32.totalorder %s162, %s163
    %p177 = scmp.eq.s32.totalorder %s19, 1
    %p178 = por %p176, %p177
    %p180 = scmp.ne.s32.totalorder %s163, %s179
    %p181 = scmp.eq.s32.totalorder %s19, 0
    %p182 = por %p180, %p181
    %p183 = scmp.le.s32.totalorder 1, %s13
    %p184 = scmp.lt.s32.totalorder %s13, 3
    %p185 = pnand %p183, %p184
    %p186 = pneg %p185
    // Predicated region
    $region9: #{encoder_block.1} parent=5 // pred_check
      _
    $region10: #{encoder_block.1} parent=5 // pred_check_branch
      %188 = sbr.rel (%p185) target = $region12
    $region11: #{encoder_block.1} parent=5 // pred_region
      %s189 = ssub.s32 %s13, 1
      // Predicated region
      $region13: #{encoder_block.1} parent=11 // pred_check
        %p190 = pneg %p60
      $region14: #{encoder_block.1} parent=11 // pred_check_branch
        %192 = sbr.rel (%p190) target = $region16
      $region15: #{encoder_block.1} parent=11 // pred_region
        _
      $region16: #{encoder_block.1} parent=11 // pred_fallthru
        _
      // Predicated region
      $region17: #{encoder_block.1} parent=11 // pred_check
        %p193 = pneg %p81
      $region18: #{encoder_block.1} parent=11 // pred_check_branch
        %195 = sbr.rel (%p193) target = $region20
      $region19: #{encoder_block.1} parent=11 // pred_region
        _
      $region20: #{encoder_block.1} parent=11 // pred_fallthru
        _
      // Predicated region
      $region21: #{encoder_block.1} parent=11 // pred_check
        %p196 = pneg %p102
      $region22: #{encoder_block.1} parent=11 // pred_check_branch
        %198 = sbr.rel (%p196) target = $region24
      $region23: #{encoder_block.1} parent=11 // pred_region
        _
      $region24: #{encoder_block.1} parent=11 // pred_fallthru
        _
      // Predicated region
      $region25: #{encoder_block.1} parent=11 // pred_check
        %p199 = pneg %p123
      $region26: #{encoder_block.1} parent=11 // pred_check_branch
        %201 = sbr.rel (%p199) target = $region28
      $region27: #{encoder_block.1} parent=11 // pred_region
        _
      $region28: #{encoder_block.1} parent=11 // pred_fallthru
        _
    $region12: #{encoder_block.1} parent=5 // pred_fallthru
      _
    %p202 = scmp.lt.s32.totalorder %s13, 2
    // Predicated region
    $region29: #{encoder_block.1} parent=5 // pred_check
      %p203 = pneg %p202
    $region30: #{encoder_block.1} parent=5 // pred_check_branch
      %205 = sbr.rel (%p203) target = $region32
    $region31: #{encoder_block.1} parent=5 // pred_region
      // Predicated region
      $region33: #{encoder_block.1} parent=31 // pred_check
        %p206 = pneg %p33
      $region34: #{encoder_block.1} parent=31 // pred_check_branch
        %208 = sbr.rel (%p206) target = $region36
      $region35: #{encoder_block.1} parent=31 // pred_region
        %s209 = smul.u32 2, %s13
        %p210 = scmp.lt.s32.totalorder %s209, 3
        %s211 = scalar_select %p210, %s209, 3
        %s212 = smul.addr %s211, 2
        %s213 = smul.addr %s212, 4
        %s214 = scalar_lea.vmem %s0, %s213
        %s215 = smul.u32 2, %s13
      $region36: #{encoder_block.1} parent=31 // pred_fallthru
        _
    $region32: #{encoder_block.1} parent=5 // pred_fallthru
      _
    %p216 = scmp.le.s32.totalorder 1, %s13
    %p217 = scmp.lt.s32.totalorder %s13, 3
    %p218 = pnand %p216, %p217
    %p219 = pneg %p218
    // Predicated region
    $region37: #{encoder_block.1} parent=5 // pred_check
      _
    $region38: #{encoder_block.1} parent=5 // pred_check_branch
      %221 = sbr.rel (%p218) target = $region40
    $region39: #{encoder_block.1} parent=5 // pred_region
      %s222 = ssub.s32 %s13, 1
      %s223 = smul.u32 2, %s18
      %p224 = scmp.lt.s32.totalorder %s223, 3
      %s225 = scalar_select %p224, %s223, 3
      %s226 = smul.addr %s225, 2
      %s227 = smul.addr %s226, 4
      %s228 = scalar_lea.vmem %s0, %s227
      %p229 = pneg %p39
      %p230 = pneg %p36
      %p231 = pneg %p60
      %p232 = pneg %p57
      %p233 = pneg %p81
      %p234 = pneg %p78
      %p235 = pneg %p102
      %p236 = pneg %p99
      %p237 = pneg %p123
      %p238 = pneg %p120
      %p239 = pneg %p149
      %p240 = pneg %p146
      %s241 = smul.u32 2, %s18
      %p242 = scmp.lt.s32.totalorder %s241, 3
      %s243 = scalar_select %p242, %s241, 3
      %s244 = smul.addr %s243, 8
      %s245 = scalar_lea.vmem %s5, %s244
      %p246 = pneg %p175
      %p247 = pneg %p172
      %p248 = scmp.lt.s32.totalorder %s18, 1
      %s249 = scalar_select %p248, %s18, 1
      %s250 = smul.addr %s249, 8
      %s251 = scalar_lea.vmem %s6, %s250
      %s252 = smul.u32 2, %s18
      %p253 = scmp.lt.s32.totalorder %s252, 3
      %s254 = scalar_select %p253, %s252, 3
      %s255 = smul.addr %s254, 2
      %s256 = smul.addr %s255, 4
      %s257 = scalar_lea.vmem %s0, %s256
      %s258 = smul.u32 2, %s18
      %s259 = smul.u32 2, %s18
      %p260 = scmp.lt.s32.totalorder %s259, 3
      %s261 = scalar_select %p260, %s259, 3
      %s262 = smul.addr %s261, 8
      %s263 = scalar_lea.vmem %s5, %s262
      %s264 = smul.u32 2, %s18
      %p265 = scmp.lt.s32.totalorder %s18, 1
      %s266 = scalar_select %p265, %s18, 1
      %s267 = smul.addr %s266, 8
      %s268 = scalar_lea.vmem %s6, %s267
      %v270 = vld [vmem:[%s257] sm:$0xff]
      %v271 = vld [vmem:[%s257 + $0x8] sm:$0xff]
      %v272 = vld [vmem:[%s1] sm:$0xf]
      %v273 = vld [vmem:[%s1 + $0x4] sm:$0xf]
      %v274 = vld [vmem:[%s1 + $0x8] sm:$0xf]
      %v275 = vld [vmem:[%s1 + $0xc] sm:$0xf]
      %v276 = vld [vmem:[%s1 + $0x10] sm:$0xf]
      %v277 = vld [vmem:[%s1 + $0x14] sm:$0xf]
      %v278 = vld [vmem:[%s1 + $0x18] sm:$0xf]
      %v279 = vld [vmem:[%s1 + $0x1c] sm:$0xf]
      %v280 = vld [vmem:[%s1 + $0x20] sm:$0xf]
      %v281 = vld [vmem:[%s1 + $0x24] sm:$0xf]
      %v282 = vld [vmem:[%s1 + $0x28] sm:$0xf]
      %v283 = vld [vmem:[%s1 + $0x2c] sm:$0xf]
      %v284 = vld [vmem:[%s1 + $0x30] sm:$0xf]
      %v285 = vld [vmem:[%s1 + $0x34] sm:$0xf]
      %v286 = vld [vmem:[%s1 + $0x38] sm:$0xf]
      %v287 = vld [vmem:[%s1 + $0x3c] sm:$0xf]
      %v288 = vld [vmem:[%s1 + $0x40] sm:$0xf]
      %v289 = vld [vmem:[%s1 + $0x44] sm:$0xf]
      %v290 = vld [vmem:[%s1 + $0x48] sm:$0xf]
      %v291 = vld [vmem:[%s1 + $0x4c] sm:$0xf]
      %v292 = vld [vmem:[%s1 + $0x50] sm:$0xf]
      %v293 = vld [vmem:[%s1 + $0x54] sm:$0xf]
      %v294 = vld [vmem:[%s1 + $0x58] sm:$0xf]
      %v295 = vld [vmem:[%s1 + $0x5c] sm:$0xf]
      %v296 = vld [vmem:[%s2] sm:$0x1]
      %v298 = vperm.slane %v296, 0
      %v302 = vunpack.c.l.b16 %v270
      %v303 = vunpack.c.h.b16 %v270
      %v304 = vunpack.c.l.b16 %v271
      %v305 = vunpack.c.h.b16 %v271
      %v306 = vpack.c.b16 %v304, %v302
      %v307 = vpack.c.b16 %v305, %v303
      %v333 = vunpack.c.l.b16 %v272
      %v334 = vunpack.c.l.b16 %v273
      %v335 = vunpack.c.l.b16 %v274
      %v336 = vunpack.c.l.b16 %v275
      %v337 = vunpack.c.l.b16 %v276
      %v338 = vunpack.c.l.b16 %v277
      %v339 = vunpack.c.l.b16 %v278
      %v340 = vunpack.c.l.b16 %v279
      %v341 = vunpack.c.l.b16 %v280
      %v342 = vunpack.c.l.b16 %v281
      %v343 = vunpack.c.l.b16 %v282
      %v344 = vunpack.c.l.b16 %v283
      %v345 = vunpack.c.l.b16 %v284
      %v346 = vunpack.c.l.b16 %v285
      %v347 = vunpack.c.l.b16 %v286
      %v348 = vunpack.c.l.b16 %v287
      %v349 = vunpack.c.l.b16 %v288
      %v350 = vunpack.c.l.b16 %v289
      %v351 = vunpack.c.l.b16 %v290
      %v352 = vunpack.c.l.b16 %v291
      %v353 = vunpack.c.l.b16 %v292
      %v354 = vunpack.c.l.b16 %v293
      %v355 = vunpack.c.l.b16 %v294
      %v356 = vunpack.c.l.b16 %v295
      %v357 = vpack.c.b16 %v334, %v333
      %v358 = vpack.c.b16 %v336, %v335
      %v359 = vpack.c.b16 %v338, %v337
      %v360 = vpack.c.b16 %v340, %v339
      %v361 = vpack.c.b16 %v342, %v341
      %v362 = vpack.c.b16 %v344, %v343
      %v363 = vpack.c.b16 %v346, %v345
      %v364 = vpack.c.b16 %v348, %v347
      %v365 = vpack.c.b16 %v350, %v349
      %v366 = vpack.c.b16 %v352, %v351
      %v367 = vpack.c.b16 %v354, %v353
      %v368 = vpack.c.b16 %v356, %v355
      %vm381 = vcmask 523264
      %v383 = vsel %vm381, %v307, 0
      %385 = vmatpush.bf16.msra.mxu0 %v364
      %386 = vmatpush.bf16.msra.mxu0 %v363
      %387 = vmatpush.bf16.msra.mxu0 %v362
      %388 = vmatpush.bf16.msra.mxu0 %v361
      %389 = vmatpush.bf16.msra.mxu0 %v360
      %390 = vmatpush.bf16.msra.mxu0 %v359
      %391 = vmatpush.bf16.msra.mxu0 %v358
      %392 = vmatpush.bf16.msra.mxu0 %v357
      %393 = vmatmul.bf16.gmra.mxu0 %v306
      %v394 = vpop.f32.mrf.mxu0
      %v395 = vadd.f32 %v298, %v394
      %v396 = vpop.f32.mrf.mxu0
      %v397 = vadd.f32 %v298, %v396
      %398 = vdwg.mxu0
      %399 = vmatpush.bf16.msra.mxu0 0
      %400 = vmatpush.bf16.msra.mxu0 0
      %401 = vmatpush.bf16.msra.mxu0 0
      %402 = vmatpush.bf16.msra.mxu0 0
      %403 = vmatpush.bf16.msra.mxu0 %v368
      %404 = vmatpush.bf16.msra.mxu0 %v367
      %405 = vmatpush.bf16.msra.mxu0 %v366
      %406 = vmatpush.bf16.msra.mxu0 %v365
      %407 = vmatmul.bf16.gmra.mxu0 %v383
      %v408 = vpop.f32.mrf.mxu0
      %v409 = vadd.f32 %v395, %v408
      %v410 = vpop.f32.mrf.mxu0
      %v411 = vadd.f32 %v397, %v410
      %412 = vdwg.mxu0
      %v413 = vmax.f32 %v409, 0.0
      %v414 = vmax.f32 %v411, 0.0
      %v415 = vlaneseq
      %v416 = vshrl.u32 %v415, 7
      %v417 = vadd.s32 %v416, 8
      %v418 = vlaneseq
      %v419 = vand.u32 %v418, 127
      %v420 = vsub.s32 %v416, 1
      %v421 = vsub.s32 %v417, 1
      %vm422 = vcmp.eq.s32.totalorder %v419, %v420
      %vm423 = vcmp.eq.s32.totalorder %v419, %v421
      %v424 = vsel %vm422, 1, 0
      %v425 = vsel %vm423, 1, 0
      %v426 = vcvt.s32.f32 %v424
      %v427 = vcvt.s32.f32 %v425
      %v428 = vadd.s32 %v416, 1
      %v429 = vadd.s32 %v417, 1
      %vm430 = vcmp.eq.s32.totalorder %v419, %v428
      %vm431 = vcmp.eq.s32.totalorder %v419, %v429
      %v432 = vsel %vm430, 1, 0
      %v433 = vsel %vm431, 1, 0
      %v434 = vcvt.s32.f32 %v432
      %v435 = vcvt.s32.f32 %v433
      %vm436 = vcmask 130048
      %v438 = vsel %vm436, %v426, 0
      %v441 = vsel %vm436, %v427, 0
      %443 = vmatpush.msra.mxu0 0.0
      %444 = vmatpush.msra.mxu0 0.0
      %445 = vmatpush.msra.mxu0 0.0
      %446 = vmatpush.msra.mxu0 0.0
      %447 = vmatpush.msra.mxu0 0.0
      %448 = vmatpush.msra.mxu0 0.0
      %449 = vmatpush.msra.mxu0 0.0
      %450 = vmatpush.msra.mxu0 0.0
      %451 = vmatpush.msra.mxu0 0.0
      %452 = vmatpush.msra.mxu0 0.0
      %453 = vmatpush.msra.mxu0 0.0
      %454 = vmatpush.msra.mxu0 0.0
      %455 = vmatpush.msra.mxu0 0.0
      %456 = vmatpush.msra.mxu0 0.0
      %457 = vmatpush.msra.mxu0 %v414
      %458 = vmatpush.msra.mxu0 %v413
      %459 = vmatmul.f32.gmra.mxu0 %v438
      %v460 = vpop.f32.mrf.mxu0
      %v461 = vadd.f32 0.0, %v460
      %462 = vmatmul.f32.gmra.mxu0 %v441
      %v463 = vpop.f32.mrf.mxu0
      %v464 = vadd.f32 0.0, %v463
      %465 = vdwg.mxu0
      %v467 = vsel %vm436, %v434, 0
      %v470 = vsel %vm436, %v435, 0
      %472 = vmatpush.msra.mxu0 0.0
      %473 = vmatpush.msra.mxu0 0.0
      %474 = vmatpush.msra.mxu0 0.0
      %475 = vmatpush.msra.mxu0 0.0
      %476 = vmatpush.msra.mxu0 0.0
      %477 = vmatpush.msra.mxu0 0.0
      %478 = vmatpush.msra.mxu0 0.0
      %479 = vmatpush.msra.mxu0 0.0
      %480 = vmatpush.msra.mxu0 0.0
      %481 = vmatpush.msra.mxu0 0.0
      %482 = vmatpush.msra.mxu0 0.0
      %483 = vmatpush.msra.mxu0 0.0
      %484 = vmatpush.msra.mxu0 0.0
      %485 = vmatpush.msra.mxu0 0.0
      %486 = vmatpush.msra.mxu0 %v414
      %487 = vmatpush.msra.mxu0 %v413
      %488 = vmatmul.f32.gmra.mxu0 %v467
      %v489 = vpop.f32.mrf.mxu0
      %v490 = vadd.f32 0.0, %v489
      %491 = vmatmul.f32.gmra.mxu0 %v470
      %v492 = vpop.f32.mrf.mxu0
      %v493 = vadd.f32 0.0, %v492
      %494 = vdwg.mxu0
      %v495 = vpack.c.bf16 %v464, %v461
      %v496 = vpack.c.bf16 %v414, %v413
      %v497 = vpack.c.bf16 %v493, %v490
      %v498 = vld [vmem:[%s3] sm:$0xf]
      %v499 = vld [vmem:[%s3 + $0x4] sm:$0xf]
      %v500 = vld [vmem:[%s3 + $0x8] sm:$0xf]
      %v501 = vld [vmem:[%s3 + $0xc] sm:$0xf]
      %v502 = vld [vmem:[%s3 + $0x10] sm:$0xf]
      %v503 = vld [vmem:[%s3 + $0x14] sm:$0xf]
      %v504 = vld [vmem:[%s3 + $0x18] sm:$0xf]
      %v505 = vld [vmem:[%s3 + $0x1c] sm:$0xf]
      %v506 = vld [vmem:[%s3 + $0x20] sm:$0xf]
      %v507 = vld [vmem:[%s3 + $0x24] sm:$0xf]
      %v508 = vld [vmem:[%s3 + $0x28] sm:$0xf]
      %v509 = vld [vmem:[%s3 + $0x2c] sm:$0xf]
      %v510 = vld [vmem:[%s3 + $0x30] sm:$0xf]
      %v511 = vld [vmem:[%s3 + $0x34] sm:$0xf]
      %v512 = vld [vmem:[%s3 + $0x38] sm:$0xf]
      %v513 = vld [vmem:[%s3 + $0x3c] sm:$0xf]
      %v514 = vld [vmem:[%s3 + $0x40] sm:$0xf]
      %v515 = vld [vmem:[%s3 + $0x44] sm:$0xf]
      %v516 = vld [vmem:[%s3 + $0x48] sm:$0xf]
      %v517 = vld [vmem:[%s3 + $0x4c] sm:$0xf]
      %v518 = vld [vmem:[%s3 + $0x50] sm:$0xf]
      %v519 = vld [vmem:[%s3 + $0x54] sm:$0xf]
      %v520 = vld [vmem:[%s3 + $0x58] sm:$0xf]
      %v521 = vld [vmem:[%s3 + $0x5c] sm:$0xf]
      %v522 = vld [vmem:[%s3 + $0x60] sm:$0xf]
      %v523 = vld [vmem:[%s3 + $0x64] sm:$0xf]
      %v524 = vld [vmem:[%s3 + $0x68] sm:$0xf]
      %v525 = vld [vmem:[%s3 + $0x6c] sm:$0xf]
      %v526 = vld [vmem:[%s3 + $0x70] sm:$0xf]
      %v527 = vld [vmem:[%s3 + $0x74] sm:$0xf]
      %v528 = vld [vmem:[%s3 + $0x78] sm:$0xf]
      %v529 = vld [vmem:[%s3 + $0x7c] sm:$0xf]
      %v530 = vld [vmem:[%s3 + $0x80] sm:$0xf]
      %v531 = vld [vmem:[%s3 + $0x84] sm:$0xf]
      %v532 = vld [vmem:[%s3 + $0x88] sm:$0xf]
      %v533 = vld [vmem:[%s3 + $0x8c] sm:$0xf]
      %v534 = vld [vmem:[%s3 + $0x90] sm:$0xf]
      %v535 = vld [vmem:[%s3 + $0x94] sm:$0xf]
      %v536 = vld [vmem:[%s3 + $0x98] sm:$0xf]
      %v537 = vld [vmem:[%s3 + $0x9c] sm:$0xf]
      %v538 = vld [vmem:[%s3 + $0xa0] sm:$0xf]
      %v539 = vld [vmem:[%s3 + $0xa4] sm:$0xf]
      %v540 = vld [vmem:[%s3 + $0xa8] sm:$0xf]
      %v541 = vld [vmem:[%s3 + $0xac] sm:$0xf]
      %v542 = vld [vmem:[%s3 + $0xb0] sm:$0xf]
      %v543 = vld [vmem:[%s3 + $0xb4] sm:$0xf]
      %v544 = vld [vmem:[%s3 + $0xb8] sm:$0xf]
      %v545 = vld [vmem:[%s3 + $0xbc] sm:$0xf]
      %v546 = vld [vmem:[%s4] sm:$0x1]
      %v548 = vperm.slane %v546, 0
      %v598 = vunpack.c.l.b16 %v498
      %v599 = vunpack.c.l.b16 %v499
      %v600 = vunpack.c.l.b16 %v500
      %v601 = vunpack.c.l.b16 %v501
      %v602 = vunpack.c.l.b16 %v502
      %v603 = vunpack.c.l.b16 %v503
      %v604 = vunpack.c.l.b16 %v504
      %v605 = vunpack.c.l.b16 %v505
      %v606 = vunpack.c.l.b16 %v506
      %v607 = vunpack.c.l.b16 %v507
      %v608 = vunpack.c.l.b16 %v508
      %v609 = vunpack.c.l.b16 %v509
      %v610 = vunpack.c.l.b16 %v510
      %v611 = vunpack.c.l.b16 %v511
      %v612 = vunpack.c.l.b16 %v512
      %v613 = vunpack.c.l.b16 %v513
      %v614 = vunpack.c.l.b16 %v514
      %v615 = vunpack.c.l.b16 %v515
      %v616 = vunpack.c.l.b16 %v516
      %v617 = vunpack.c.l.b16 %v517
      %v618 = vunpack.c.l.b16 %v518
      %v619 = vunpack.c.l.b16 %v519
      %v620 = vunpack.c.l.b16 %v520
      %v621 = vunpack.c.l.b16 %v521
      %v622 = vunpack.c.l.b16 %v522
      %v623 = vunpack.c.l.b16 %v523
      %v624 = vunpack.c.l.b16 %v524
      %v625 = vunpack.c.l.b16 %v525
      %v626 = vunpack.c.l.b16 %v526
      %v627 = vunpack.c.l.b16 %v527
      %v628 = vunpack.c.l.b16 %v528
      %v629 = vunpack.c.l.b16 %v529
      %v630 = vunpack.c.l.b16 %v530
      %v631 = vunpack.c.l.b16 %v531
      %v632 = vunpack.c.l.b16 %v532
      %v633 = vunpack.c.l.b16 %v533
      %v634 = vunpack.c.l.b16 %v534
      %v635 = vunpack.c.l.b16 %v535
      %v636 = vunpack.c.l.b16 %v536
      %v637 = vunpack.c.l.b16 %v537
      %v638 = vunpack.c.l.b16 %v538
      %v639 = vunpack.c.l.b16 %v539
      %v640 = vunpack.c.l.b16 %v540
      %v641 = vunpack.c.l.b16 %v541
      %v642 = vunpack.c.l.b16 %v542
      %v643 = vunpack.c.l.b16 %v543
      %v644 = vunpack.c.l.b16 %v544
      %v645 = vunpack.c.l.b16 %v545
      %v646 = vpack.c.b16 %v599, %v598
      %v647 = vpack.c.b16 %v601, %v600
      %v648 = vpack.c.b16 %v603, %v602
      %v649 = vpack.c.b16 %v605, %v604
      %v650 = vpack.c.b16 %v607, %v606
      %v651 = vpack.c.b16 %v609, %v608
      %v652 = vpack.c.b16 %v611, %v610
      %v653 = vpack.c.b16 %v613, %v612
      %v654 = vpack.c.b16 %v615, %v614
      %v655 = vpack.c.b16 %v617, %v616
      %v656 = vpack.c.b16 %v619, %v618
      %v657 = vpack.c.b16 %v621, %v620
      %v658 = vpack.c.b16 %v623, %v622
      %v659 = vpack.c.b16 %v625, %v624
      %v660 = vpack.c.b16 %v627, %v626
      %v661 = vpack.c.b16 %v629, %v628
      %v662 = vpack.c.b16 %v631, %v630
      %v663 = vpack.c.b16 %v633, %v632
      %v664 = vpack.c.b16 %v635, %v634
      %v665 = vpack.c.b16 %v637, %v636
      %v666 = vpack.c.b16 %v639, %v638
      %v667 = vpack.c.b16 %v641, %v640
      %v668 = vpack.c.b16 %v643, %v642
      %v669 = vpack.c.b16 %v645, %v644
      %694 = vmatpush.bf16.msra.mxu0 %v653
      %695 = vmatpush.bf16.msra.mxu0 %v652
      %696 = vmatpush.bf16.msra.mxu0 %v651
      %697 = vmatpush.bf16.msra.mxu0 %v650
      %698 = vmatpush.bf16.msra.mxu0 %v649
      %699 = vmatpush.bf16.msra.mxu0 %v648
      %700 = vmatpush.bf16.msra.mxu0 %v647
      %701 = vmatpush.bf16.msra.mxu0 %v646
      %702 = vmatmul.bf16.gmra.mxu0 %v495
      %v703 = vpop.f32.mrf.mxu0
      %v704 = vadd.f32 %v548, %v703
      %v705 = vpop.f32.mrf.mxu0
      %v706 = vadd.f32 %v548, %v705
      %707 = vdwg.mxu0
      %708 = vmatpush.bf16.msra.mxu0 %v661
      %709 = vmatpush.bf16.msra.mxu0 %v660
      %710 = vmatpush.bf16.msra.mxu0 %v659
      %711 = vmatpush.bf16.msra.mxu0 %v658
      %712 = vmatpush.bf16.msra.mxu0 %v657
      %713 = vmatpush.bf16.msra.mxu0 %v656
      %714 = vmatpush.bf16.msra.mxu0 %v655
      %715 = vmatpush.bf16.msra.mxu0 %v654
      %716 = vmatmul.bf16.gmra.mxu0 %v496
      %v717 = vpop.f32.mrf.mxu0
      %v718 = vadd.f32 %v704, %v717
      %v719 = vpop.f32.mrf.mxu0
      %v720 = vadd.f32 %v706, %v719
      %721 = vdwg.mxu0
      %722 = vmatpush.bf16.msra.mxu0 %v669
      %723 = vmatpush.bf16.msra.mxu0 %v668
      %724 = vmatpush.bf16.msra.mxu0 %v667
      %725 = vmatpush.bf16.msra.mxu0 %v666
      %726 = vmatpush.bf16.msra.mxu0 %v665
      %727 = vmatpush.bf16.msra.mxu0 %v664
      %728 = vmatpush.bf16.msra.mxu0 %v663
      %729 = vmatpush.bf16.msra.mxu0 %v662
      %730 = vmatmul.bf16.gmra.mxu0 %v497
      %v731 = vpop.f32.mrf.mxu0
      %v732 = vadd.f32 %v718, %v731
      %v733 = vpop.f32.mrf.mxu0
      %v734 = vadd.f32 %v720, %v733
      %735 = vdwg.mxu0
      %v736 = vmax.f32 %v732, 0.0
      %v737 = vmax.f32 %v734, 0.0
      %738 = vst [vmem:[%s263] sm:$0xff] %v736
      %739 = vst [vmem:[%s263 + $0x8] sm:$0xff] %v737
      %v740 = vmul.u32 %v416, 2
      %vm741 = vcmp.eq.s32.totalorder %v419, %v740
      %v742 = vsel %vm741, 1, 0
      %v743 = vcvt.s32.f32 %v742
      %v744 = vadd.s32 %v740, 1
      %vm745 = vcmp.eq.s32.totalorder %v419, %v744
      %v746 = vsel %vm745, 1, 0
      %v747 = vcvt.s32.f32 %v746
      %v749 = vsel %vm436, %v743, 0
      %751 = vmatpush.msra.mxu0 0.0
      %752 = vmatpush.msra.mxu0 0.0
      %753 = vmatpush.msra.mxu0 0.0
      %754 = vmatpush.msra.mxu0 0.0
      %755 = vmatpush.msra.mxu0 0.0
      %756 = vmatpush.msra.mxu0 0.0
      %757 = vmatpush.msra.mxu0 0.0
      %758 = vmatpush.msra.mxu0 0.0
      %759 = vmatpush.msra.mxu0 0.0
      %760 = vmatpush.msra.mxu0 0.0
      %761 = vmatpush.msra.mxu0 0.0
      %762 = vmatpush.msra.mxu0 0.0
      %763 = vmatpush.msra.mxu0 0.0
      %764 = vmatpush.msra.mxu0 0.0
      %765 = vmatpush.msra.mxu0 %v737
      %766 = vmatpush.msra.mxu0 %v736
      %767 = vmatmul.f32.gmra.mxu0 %v749
      %v768 = vpop.f32.mrf.mxu0
      %v769 = vadd.f32 0.0, %v768
      %770 = vdwg.mxu0
      %v772 = vsel %vm436, %v747, 0
      %774 = vmatpush.msra.mxu0 0.0
      %775 = vmatpush.msra.mxu0 0.0
      %776 = vmatpush.msra.mxu0 0.0
      %777 = vmatpush.msra.mxu0 0.0
      %778 = vmatpush.msra.mxu0 0.0
      %779 = vmatpush.msra.mxu0 0.0
      %780 = vmatpush.msra.mxu0 0.0
      %781 = vmatpush.msra.mxu0 0.0
      %782 = vmatpush.msra.mxu0 0.0
      %783 = vmatpush.msra.mxu0 0.0
      %784 = vmatpush.msra.mxu0 0.0
      %785 = vmatpush.msra.mxu0 0.0
      %786 = vmatpush.msra.mxu0 0.0
      %787 = vmatpush.msra.mxu0 0.0
      %788 = vmatpush.msra.mxu0 %v737
      %789 = vmatpush.msra.mxu0 %v736
      %790 = vmatmul.f32.gmra.mxu0 %v772
      %v791 = vpop.f32.mrf.mxu0
      %v792 = vadd.f32 0.0, %v791
      %793 = vdwg.mxu0
      %v794 = vmax.f32 %v769, %v792
      %795 = vrot.lane.b32.xlu0 %v794, 120
      %v796 = vpop.permute.xlu0 %795
      %v797 = vmax.f32 %v794, %v796
      %798 = vst [vmem:[%s268] sm:$0xff] %v797
      %s799 = smul.u32 2, %s18
      %p800 = scmp.lt.s32.totalorder %s799, 3
      %s801 = scalar_select %p800, %s799, 3
      %s802 = smul.addr %s801, 8
      %s803 = scalar_lea.vmem %s5, %s802
      %p804 = scmp.lt.s32.totalorder %s18, 1
      %s805 = scalar_select %p804, %s18, 1
      %s806 = smul.addr %s805, 8
      %s807 = scalar_lea.vmem %s6, %s806
      // Predicated region
      $region41: #{encoder_block.1} parent=39 // pred_check
        %p808 = pneg %p146
      $region42: #{encoder_block.1} parent=39 // pred_check_branch
        %810 = sbr.rel (%p808) target = $region44
      $region43: #{encoder_block.1} parent=39 // pred_region
        %s811 = smul.u32 2, %s18
      $region44: #{encoder_block.1} parent=39 // pred_fallthru
        _
      // Predicated region
      $region45: #{encoder_block.1} parent=39 // pred_check
        %p812 = pneg %p172
      $region46: #{encoder_block.1} parent=39 // pred_check_branch
        %814 = sbr.rel (%p812) target = $region48
      $region47: #{encoder_block.1} parent=39 // pred_region
        _
      $region48: #{encoder_block.1} parent=39 // pred_fallthru
        _
    $region40: #{encoder_block.1} parent=5 // pred_fallthru
      _
    %p815 = scmp.le.s32.totalorder 2, %s13
    // Predicated region
    $region49: #{encoder_block.1} parent=5 // pred_check
      %p816 = pneg %p815
    $region50: #{encoder_block.1} parent=5 // pred_check_branch
      %818 = sbr.rel (%p816) target = $region52
    $region51: #{encoder_block.1} parent=5 // pred_region
      %s819 = ssub.s32 %s13, 2
      // Predicated region
      $region53: #{encoder_block.1} parent=51 // pred_check
        %p820 = pneg %p152
      $region54: #{encoder_block.1} parent=51 // pred_check_branch
        %822 = sbr.rel (%p820) target = $region56
      $region55: #{encoder_block.1} parent=51 // pred_region
        %s823 = smul.u32 2, %s19
        %p824 = scmp.lt.s32.totalorder %s823, 3
        %s825 = scalar_select %p824, %s823, 3
        %s826 = smul.addr %s825, 8
        %s827 = scalar_lea.vmem %s5, %s826
      $region56: #{encoder_block.1} parent=51 // pred_fallthru
        _
      // Predicated region
      $region57: #{encoder_block.1} parent=51 // pred_check
        %p828 = pneg %p178
      $region58: #{encoder_block.1} parent=51 // pred_check_branch
        %830 = sbr.rel (%p828) target = $region60
      $region59: #{encoder_block.1} parent=51 // pred_region
        %p831 = scmp.lt.s32.totalorder %s19, 1
        %s832 = scalar_select %p831, %s19, 1
        %s833 = smul.addr %s832, 8
        %s834 = scalar_lea.vmem %s6, %s833
      $region60: #{encoder_block.1} parent=51 // pred_fallthru
        _
    $region52: #{encoder_block.1} parent=5 // pred_fallthru
      _
  $region6: #{encoder_block.1} parent=0 // loop_footer
    %s17 = sadd.s32 1, %s13
  $region7: #{encoder_block.1} parent=0 // loop_footer_branch
    %12 = sbr.rel target = $region3
  $region8: #{encoder_block.1} parent=0 // loop_exit
    _

</llo_original>
